<compile_context>
chip_gen: v5e
topology: v5e:2x2
jax: 0.10.0
libtpu: 0.0.40
codegen_flags: <defaults>
</compile_context>

<pallas_src>
import functools

import jax
import jax.numpy as jnp
import numpy as np
from jax.experimental import pallas as pl
from jax.experimental.pallas import tpu as pltpu


def _round_up(x, m):
    return ((x + m - 1) // m) * m


def _vmem_caps():
    """Returns (per-core VMEM capacity bytes, planning budget bytes)."""
    kind = ""
    try:
        kind = (jax.devices()[0].device_kind or "").lower()
    except Exception:
        pass
    cap = None
    try:
        cap = int(pltpu.get_tpu_info().vmem_capacity_bytes)
    except Exception:
        cap = None
    if not cap or cap <= 0:
        # Platform-aware fallback: v5e / v6e have 128 MiB, otherwise be conservative.
        cap = 128 * 1024 * 1024 if ("v5" in kind or "v6" in kind) else 64 * 1024 * 1024
    # v7x has 2 TensorCores per chip; if the query reports per-chip VMEM, clamp to
    # the 64 MiB per-TC figure so each core's resident copy of U still fits.
    if "7" in kind and cap > 64 * 1024 * 1024:
        cap = 64 * 1024 * 1024
    return cap, int(cap * 0.7)


def _biaffine_kernel(d_ref, et_ref, u_ref, cold_ref, rowe_ref, md_ref, me_ref, o_ref,
                     *, label_axis):
    # Per-step views:
    #   d_ref    [1, Tld, Ddp]          compute dtype (bf16 by default)
    #   et_ref   [1, Dep, Lep]          compute dtype (input_e pre-transposed)
    #   u_ref    [L, Ddp, Dep] resident or [Lc, Ddp, Dep] chunk; label via program_id
    #   cold_ref [1, 1, Tld, 1]  f32    (W_d . d + b), sublane column
    #   rowe_ref [1, 1, 1, Lep]  f32    (W_e . e), lane row
    #   md_ref   [1, Tld, 1]     f32
    #   me_ref   [1, 1, Lep]     f32
    #   o_ref    [1, 1, Tld, Lep]
    d = d_ref[0]
    et = et_ref[0]
    u = u_ref[pl.program_id(label_axis)]

    # Bi-affine term on the MXU. e is pre-transposed, so both dots contract along
    # the sublane dim. f32 accumulation; single bf16 round of the intermediate.
    x = jnp.dot(d, u, preferred_element_type=jnp.float32).astype(d.dtype)   # [Tld, Dep]
    s = jnp.dot(x, et, preferred_element_type=jnp.float32)                  # [Tld, Lep]

    # Epilogue: pure f32 VPU broadcasts (bias already folded into the column term).
    s = s + cold_ref[0, 0] + rowe_ref[0, 0]
    s = s * md_ref[0] * me_ref[0]
    o_ref[0, 0] = s.astype(o_ref.dtype)


def biaffine_attention(input_d, input_e, W_d, W_e, b, U, mask_d=None, mask_e=None,
                       *, compute_dtype=jnp.bfloat16, out_dtype=jnp.float32,
                       max_ld_tile=1024):
    """Forward pass of BiAAttention (biaffine=True). Returns [B, L, Ld, Le]."""
    B, Ld, Dd = input_d.shape
    Be, Le, De = input_e.shape
    assert B == Be, "batch sizes of encoder and decoder must be equal"
    L = W_d.shape[0]
    f32 = jnp.float32

    if mask_d is None:
        mask_d = jnp.ones((B, Ld), f32)
    if mask_e is None:
        mask_e = jnp.ones((B, Le), f32)

    # --- Rank-1 linear terms: tiny, computed once in XLA in exact f32; bias folded
    # into the column term so the kernel epilogue is just adds + mask multiplies.
    cold = jnp.einsum('ld,btd->blt', W_d.astype(f32), input_d.astype(f32)) \
        + b.reshape(1, L, 1).astype(f32)                                      # [B, L, Ld]
    rowe = jnp.einsum('le,bse->bls', W_e.astype(f32), input_e.astype(f32))    # [B, L, Le]

    # --- Pad to TPU-friendly shapes: lane dims (Le, Dd, De) -> x128, Ld -> x8.
    Lep = _round_up(max(Le, 128), 128)
    Ddp = _round_up(max(Dd, 128), 128)
    Dep = _round_up(max(De, 128), 128)
    Ldp = _round_up(max(Ld, 8), 8)

    cbytes = jnp.dtype(compute_dtype).itemsize
    obytes = jnp.dtype(out_dtype).itemsize
    cap, budget = _vmem_caps()

    # Approximate VMEM cost model (double-buffered blocked operands + f32 scratch).
    per_row = 2 * Ddp * cbytes + 2 * Lep * obytes + Dep * 4 + 16   # d row, out row, x row, cold/md
    fixed = 2 * Dep * Lep * cbytes + 4 * Lep * 4                   # e^T + rowe/me

    u_full = L * Ddp * Dep * cbytes          # single copy (memory_space=VMEM, no double buffer)
    min_tld = min(Ldp, 256)
    u_resident = (u_full + fixed + per_row * min_tld) <= budget

    if u_resident:
        avail = budget - u_full - fixed
        Lc, nLc = L, 1
    else:
        # Two-level label blocking: largest label chunk (double-buffered) in ~half
        # the budget; each U slab is still DMA'd exactly once, while d/e^T/masks
        # re-stream only ceil(L/Lc) times instead of L times.
        u_chunk_per_label = 2 * Ddp * Dep * cbytes
        Lc = max(1, min(L, int((budget // 2) // u_chunk_per_label)))
        nLc = -(-L // Lc)
        avail = budget - Lc * u_chunk_per_label - fixed

    # Budget-driven Ld tile (lane-dense output slab); pad Ldp UP to a multiple of
    # Tld instead of shrinking Tld for awkward Ld.
    Tld = max(8, min(max_ld_tile, Ldp, (int(avail) // int(per_row)) // 8 * 8))
    Ldp = _round_up(Ldp, Tld)
    nld = Ldp // Tld
    Lpad = nLc * Lc

    # --- Padded operands (padded regions are zero and sliced off at the end).
    d_p = jnp.pad(input_d, ((0, 0), (0, Ldp - Ld), (0, Ddp - Dd))).astype(compute_dtype)
    # Pre-transpose e once in XLA: [B, De, Le] -> contraction dim on sublanes.
    e_t = jnp.pad(jnp.swapaxes(input_e, 1, 2),
                  ((0, 0), (0, Dep - De), (0, Lep - Le))).astype(compute_dtype)
    u_p = jnp.pad(U, ((0, Lpad - L), (0, Ddp - Dd), (0, Dep - De))).astype(compute_dtype)

    cold_p = jnp.pad(cold, ((0, 0), (0, Lpad - L), (0, Ldp - Ld))).reshape(B, Lpad, Ldp, 1)
    rowe_p = jnp.pad(rowe, ((0, 0), (0, Lpad - L), (0, Lep - Le))).reshape(B, Lpad, 1, Lep)
    md_p = jnp.pad(mask_d.astype(f32), ((0, 0), (0, Ldp - Ld))).reshape(B, Ldp, 1)
    me_p = jnp.pad(mask_e.astype(f32), ((0, 0), (0, Lep - Le))).reshape(B, 1, Lep)

    if u_resident:
        # Grid (batch, ld-tile, label): label innermost so the d tile / md mask stay
        # resident across all labels; U is a single whole-array VMEM operand.
        grid = (B, nld, L)
        label_axis = 2
        u_spec = pl.BlockSpec(memory_space=pltpu.MemorySpace.VMEM)
        d_spec = pl.BlockSpec((1, Tld, Ddp), lambda bi, ti, li: (bi, ti, 0))
        et_spec = pl.BlockSpec((1, Dep, Lep), lambda bi, ti, li: (bi, 0, 0))
        cold_spec = pl.BlockSpec((1, 1, Tld, 1), lambda bi, ti, li: (bi, li, ti, 0))
        rowe_spec = pl.BlockSpec((1, 1, 1, Lep), lambda bi, ti, li: (bi, li, 0, 0))
        md_spec = pl.BlockSpec((1, Tld, 1), lambda bi, ti, li: (bi, ti, 0))
        me_spec = pl.BlockSpec((1, 1, Lep), lambda bi, ti, li: (bi, 0, 0))
        out_spec = pl.BlockSpec((1, 1, Tld, Lep), lambda bi, ti, li: (bi, li, ti, 0))
    else:
        # Label-chunked streaming: chunk axis outermost (each U chunk DMA'd once),
        # label-within-chunk innermost (d tile resident across it).
        grid = (nLc, B, nld, Lc)
        label_axis = 3
        u_spec = pl.BlockSpec((Lc, Ddp, Dep), lambda ci, bi, ti, li: (ci, 0, 0))
        d_spec = pl.BlockSpec((1, Tld, Ddp), lambda ci, bi, ti, li: (bi, ti, 0))
        et_spec = pl.BlockSpec((1, Dep, Lep), lambda ci, bi, ti, li: (bi, 0, 0))
        cold_spec = pl.BlockSpec((1, 1, Tld, 1),
                                 lambda ci, bi, ti, li: (bi, ci * Lc + li, ti, 0))
        rowe_spec = pl.BlockSpec((1, 1, 1, Lep),
                                 lambda ci, bi, ti, li: (bi, ci * Lc + li, 0, 0))
        md_spec = pl.BlockSpec((1, Tld, 1), lambda ci, bi, ti, li: (bi, ti, 0))
        me_spec = pl.BlockSpec((1, 1, Lep), lambda ci, bi, ti, li: (bi, 0, 0))
        out_spec = pl.BlockSpec((1, 1, Tld, Lep),
                                lambda ci, bi, ti, li: (bi, ci * Lc + li, ti, 0))

    kernel = functools.partial(_biaffine_kernel, label_axis=label_axis)

    out_p = pl.pallas_call(
        kernel,
        out_shape=jax.ShapeDtypeStruct((B, Lpad, Ldp, Lep), out_dtype),
        grid_spec=pltpu.PrefetchScalarGridSpec(
            num_scalar_prefetch=0,
            grid=grid,
            in_specs=[d_spec, et_spec, u_spec, cold_spec, rowe_spec, md_spec, me_spec],
            out_specs=out_spec,
        ),
        compiler_params=pltpu.CompilerParams(
            # No carried accumulator anywhere -> every grid axis is parallel.
            dimension_semantics=("parallel",) * len(grid),
            vmem_limit_bytes=int(cap * 0.9),
        ),
    )(d_p, e_t, u_p, cold_p, rowe_p, md_p, me_p)

    return out_p[:, :L, :Ld, :Le]


def _xavier_uniform(key, shape):
    # matches nn.init.xavier_uniform_ (fan over last two dims)
    fan_in, fan_out = shape[-1], shape[-2]
    bound = float(np.sqrt(6.0 / (fan_in + fan_out)))
    return jax.random.uniform(key, shape, jnp.float32, -bound, bound)


def _reference(input_d, input_e, W_d, W_e, b, U, mask_d, mask_e):
    out_d = jnp.einsum('ld,btd->blt', W_d, input_d)[..., None]       # [B, L, Ld, 1]
    out_e = jnp.einsum('le,bse->bls', W_e, input_e)[:, :, None, :]   # [B, L, 1, Le]
    tmp = jnp.einsum('btd,lde->blte', input_d, U)                    # [B, L, Ld, De]
    out = jnp.einsum('blte,bse->blts', tmp, input_e)                 # [B, L, Ld, Le]
    out = out + out_d + out_e + b[None, :, :, :]
    out = out * mask_d[:, None, :, None] * mask_e[:, None, None, :]
    return out


if __name__ == "__main__":
    B, Ld, Le = 2, 8, 8
    Dd, De = 32, 32
    num_labels = 4

    key = jax.random.PRNGKey(0)
    k1, k2, k3, k4, k5, k6, k7 = jax.random.split(key, 7)

    input_d = jax.random.normal(k1, (B, Ld, Dd), jnp.float32)
    input_e = jax.random.normal(k2, (B, Le, De), jnp.float32)

    W_d = _xavier_uniform(k3, (num_labels, Dd))
    W_e = _xavier_uniform(k4, (num_labels, De))
    b = jnp.zeros((num_labels, 1, 1), jnp.float32)
    U = _xavier_uniform(k5, (num_labels, Dd, De))

    mask_d = (jax.random.uniform(k6, (B, Ld)) > 0.2).astype(jnp.float32)
    mask_e = (jax.random.uniform(k7, (B, Le)) > 0.2).astype(jnp.float32)

    out = biaffine_attention(input_d, input_e, W_d, W_e, b, U, mask_d, mask_e)
    out = jax.block_until_ready(out)

    ref = _reference(input_d, input_e, W_d, W_e, b, U, mask_d, mask_e)
    # Biaffine matmuls run with bf16 operands (f32 MXU accumulation); rank-1 terms
    # and bias are exact f32, so bf16-level tolerance on the quadratic term only.
    np.testing.assert_allclose(np.asarray(out), np.asarray(ref), rtol=3e-2, atol=2e-1)

    print("KERNEL_OK")
</pallas_src>

<mosaic_0001>
module attributes {stable_mosaic.version = 11 : i64} {
  func.func @_biaffine_kernel(%arg0: i32, %arg1: i32, %arg2: i32, %arg3: memref<1x8x128xbf16, #tpu.memory_space<vmem>>, %arg4: memref<1x128x128xbf16, #tpu.memory_space<vmem>>, %arg5: memref<4x128x128xbf16, #tpu.memory_space<vmem>>, %arg6: memref<1x1x8x1xf32, #tpu.memory_space<vmem>>, %arg7: memref<1x1x1x128xf32, #tpu.memory_space<vmem>>, %arg8: memref<1x8x1xf32, #tpu.memory_space<vmem>>, %arg9: memref<1x1x128xf32, #tpu.memory_space<vmem>>, %arg10: memref<1x1x8x128xf32, #tpu.memory_space<vmem>>) attributes {dimension_semantics = [#tpu.dimension_semantics<parallel>, #tpu.dimension_semantics<parallel>, #tpu.dimension_semantics<parallel>], iteration_bounds = array<i64: 2, 1, 4>, scalar_prefetch = 0 : i64, scratch_operands = 0 : i64, tpu.core_type = #tpu.core_type<tc>, window_params = [{transform_indices = @transform_0, window_bounds = array<i64: 1, 8, 128>}, {transform_indices = @transform_1, window_bounds = array<i64: 1, 128, 128>}, {pipeline_mode = #tpu.pipeline_mode<synchronous>, transform_indices = @transform_2, window_bounds = array<i64: 4, 128, 128>}, {transform_indices = @transform_3, window_bounds = array<i64: 1, 1, 8, 1>}, {transform_indices = @transform_4, window_bounds = array<i64: 1, 1, 1, 128>}, {transform_indices = @transform_5, window_bounds = array<i64: 1, 8, 1>}, {transform_indices = @transform_6, window_bounds = array<i64: 1, 1, 128>}, {transform_indices = @transform_7, window_bounds = array<i64: 1, 1, 8, 128>}]} {
    %c0 = arith.constant 0 : index
    %c0_0 = arith.constant 0 : index
    %c0_1 = arith.constant 0 : index
    %0 = vector.load %arg3[%c0, %c0_0, %c0_1] : memref<1x8x128xbf16, #tpu.memory_space<vmem>>, vector<1x8x128xbf16>
    %1 = vector.shape_cast %0 : vector<1x8x128xbf16> to vector<8x128xbf16>
    %c0_2 = arith.constant 0 : index
    %c0_3 = arith.constant 0 : index
    %c0_4 = arith.constant 0 : index
    %2 = vector.load %arg4[%c0_2, %c0_3, %c0_4] : memref<1x128x128xbf16, #tpu.memory_space<vmem>>, vector<1x128x128xbf16>
    %3 = vector.shape_cast %2 : vector<1x128x128xbf16> to vector<128x128xbf16>
    %4 = arith.index_cast %arg2 : i32 to index
    %c0_5 = arith.constant 0 : index
    %c0_6 = arith.constant 0 : index
    %5 = vector.load %arg5[%4, %c0_5, %c0_6] : memref<4x128x128xbf16, #tpu.memory_space<vmem>>, vector<1x128x128xbf16>
    %6 = vector.shape_cast %5 : vector<1x128x128xbf16> to vector<128x128xbf16>
    %cst = arith.constant dense<0.000000e+00> : vector<8x128xf32>
    %7 = tpu.matmul %1, %6, %cst {dimension_numbers = #tpu.dot_dimension_numbers<[1], [0], [0], [1], [0, 0, 1, 1], [], []>} : vector<8x128xbf16>, vector<128x128xbf16>, vector<8x128xf32> -> vector<8x128xf32>
    %8 = arith.truncf %7 : vector<8x128xf32> to vector<8x128xbf16>
    %cst_7 = arith.constant dense<0.000000e+00> : vector<8x128xf32>
    %9 = tpu.matmul %8, %3, %cst_7 {dimension_numbers = #tpu.dot_dimension_numbers<[1], [0], [0], [1], [0, 0, 1, 1], [], []>} : vector<8x128xbf16>, vector<128x128xbf16>, vector<8x128xf32> -> vector<8x128xf32>
    %c0_8 = arith.constant 0 : index
    %c0_9 = arith.constant 0 : index
    %c0_10 = arith.constant 0 : index
    %c0_11 = arith.constant 0 : index
    %10 = vector.load %arg6[%c0_8, %c0_9, %c0_10, %c0_11] : memref<1x1x8x1xf32, #tpu.memory_space<vmem>>, vector<1x1x8x1xf32>
    %11 = vector.shape_cast %10 : vector<1x1x8x1xf32> to vector<8x1xf32>
    %12 = vector.broadcast %11 : vector<8x1xf32> to vector<8x128xf32>
    %13 = arith.addf %9, %12 : vector<8x128xf32>
    %c0_12 = arith.constant 0 : index
    %c0_13 = arith.constant 0 : index
    %c0_14 = arith.constant 0 : index
    %c0_15 = arith.constant 0 : index
    %14 = vector.load %arg7[%c0_12, %c0_13, %c0_14, %c0_15] : memref<1x1x1x128xf32, #tpu.memory_space<vmem>>, vector<1x1x1x128xf32>
    %15 = vector.shape_cast %14 : vector<1x1x1x128xf32> to vector<1x128xf32>
    %16 = vector.broadcast %15 : vector<1x128xf32> to vector<8x128xf32>
    %17 = arith.addf %13, %16 : vector<8x128xf32>
    %c0_16 = arith.constant 0 : index
    %c0_17 = arith.constant 0 : index
    %c0_18 = arith.constant 0 : index
    %18 = vector.load %arg8[%c0_16, %c0_17, %c0_18] : memref<1x8x1xf32, #tpu.memory_space<vmem>>, vector<1x8x1xf32>
    %19 = vector.shape_cast %18 : vector<1x8x1xf32> to vector<8x1xf32>
    %20 = vector.broadcast %19 : vector<8x1xf32> to vector<8x128xf32>
    %21 = arith.mulf %17, %20 : vector<8x128xf32>
    %c0_19 = arith.constant 0 : index
    %c0_20 = arith.constant 0 : index
    %c0_21 = arith.constant 0 : index
    %22 = vector.load %arg9[%c0_19, %c0_20, %c0_21] : memref<1x1x128xf32, #tpu.memory_space<vmem>>, vector<1x1x128xf32>
    %23 = vector.shape_cast %22 : vector<1x1x128xf32> to vector<1x128xf32>
    %24 = vector.broadcast %23 : vector<1x128xf32> to vector<8x128xf32>
    %25 = arith.mulf %21, %24 : vector<8x128xf32>
    %c0_22 = arith.constant 0 : index
    %c0_23 = arith.constant 0 : index
    %c0_24 = arith.constant 0 : index
    %c0_25 = arith.constant 0 : index
    %26 = vector.load %arg10[%c0_22, %c0_23, %c0_24, %c0_25] : memref<1x1x8x128xf32, #tpu.memory_space<vmem>>, vector<1x1x8x128xf32>
    %27 = vector.shape_cast %26 : vector<1x1x8x128xf32> to vector<8x128xf32>
    %28 = vector.shape_cast %25 : vector<8x128xf32> to vector<1x1x8x128xf32>
    tpu.vector_store %arg10[%c0_22, %c0_23, %c0_24, %c0_25], %28 {strides = array<i32>} : memref<1x1x8x128xf32, #tpu.memory_space<vmem>>, vector<1x1x8x128xf32>,
    return
  }
  func.func @transform_0(%arg0: i32, %arg1: i32, %arg2: i32) -> (i32, i32, i32) {
    %c0_i32 = arith.constant 0 : i32
    %c0_i32_0 = arith.constant 0 : i32
    return %arg0, %arg1, %c0_i32 : i32, i32, i32
  }
  func.func @transform_1(%arg0: i32, %arg1: i32, %arg2: i32) -> (i32, i32, i32) {
    %c0_i32 = arith.constant 0 : i32
    %c0_i32_0 = arith.constant 0 : i32
    %c0_i32_1 = arith.constant 0 : i32
    return %arg0, %c0_i32, %c0_i32_0 : i32, i32, i32
  }
  func.func @transform_2(%arg0: i32, %arg1: i32, %arg2: i32) -> (i32, i32, i32) {
    %c0_i32 = arith.constant 0 : i32
    %c0_i32_0 = arith.constant 0 : i32
    %c0_i32_1 = arith.constant 0 : i32
    %c0_i32_2 = arith.constant 0 : i32
    return %c0_i32, %c0_i32_0, %c0_i32_1 : i32, i32, i32
  }
  func.func @transform_3(%arg0: i32, %arg1: i32, %arg2: i32) -> (i32, i32, i32, i32) {
    %c0_i32 = arith.constant 0 : i32
    %c0_i32_0 = arith.constant 0 : i32
    return %arg0, %arg2, %arg1, %c0_i32 : i32, i32, i32, i32
  }
  func.func @transform_4(%arg0: i32, %arg1: i32, %arg2: i32) -> (i32, i32, i32, i32) {
    %c0_i32 = arith.constant 0 : i32
    %c0_i32_0 = arith.constant 0 : i32
    %c0_i32_1 = arith.constant 0 : i32
    return %arg0, %arg2, %c0_i32, %c0_i32_0 : i32, i32, i32, i32
  }
  func.func @transform_5(%arg0: i32, %arg1: i32, %arg2: i32) -> (i32, i32, i32) {
    %c0_i32 = arith.constant 0 : i32
    %c0_i32_0 = arith.constant 0 : i32
    return %arg0, %arg1, %c0_i32 : i32, i32, i32
  }
  func.func @transform_6(%arg0: i32, %arg1: i32, %arg2: i32) -> (i32, i32, i32) {
    %c0_i32 = arith.constant 0 : i32
    %c0_i32_0 = arith.constant 0 : i32
    %c0_i32_1 = arith.constant 0 : i32
    return %arg0, %c0_i32, %c0_i32_0 : i32, i32, i32
  }
  func.func @transform_7(%arg0: i32, %arg1: i32, %arg2: i32) -> (i32, i32, i32, i32) {
    %c0_i32 = arith.constant 0 : i32
    %c0_i32_0 = arith.constant 0 : i32
    return %arg0, %arg2, %arg1, %c0_i32 : i32, i32, i32, i32
  }
}

</mosaic_0001>

<llo_original>
// kernel: tpu_custom_call.1
$region0: #{tpu_custom_call.1}
  #allocation0 [shape = 'u32[]', space=smem, size = 0x4, offset = 0x4, fixed_abs, tag = 'smem constant byte address 0x4 - core index']
  #allocation1 [shape = 'u32[72,128]{1,0:T(1,128)}', space=vmem, size = 0x9000, scoped, tag = 'internal scratch']
  %s0 = inlined_call_operand.vmem [shape: bf16[2,8,128], index: 0, kind: input, shape index: {}]
  %s1 = inlined_call_operand.hbm [shape: bf16[2,128,128], index: 1, kind: input, shape index: {}]
  %s2 = inlined_call_operand.hbm [shape: bf16[4,128,128], index: 2, kind: input, shape index: {}]
  %s3 = inlined_call_operand.vmem [shape: f32[2,4,8,1], index: 3, kind: input, shape index: {}]
  %s4 = inlined_call_operand.vmem [shape: f32[2,4,1,128], index: 4, kind: input, shape index: {}]
  %s5 = inlined_call_operand.vmem [shape: f32[2,8,1], index: 5, kind: input, shape index: {}]
  %s6 = inlined_call_operand.vmem [shape: f32[2,1,128], index: 6, kind: input, shape index: {}]
  %s7 = inlined_call_operand.hbm [shape: f32[2,4,8,128], index: 7, kind: output, shape index: {}]
  %s8 = sld [smem:[#allocation0]]
  $region69: #{tpu_custom_call.1} parent=0
    _
  %s10 = ssub.s32 1, %s8
  %s11 = scalar_select 0, %s10, %s8
  $region1: #{tpu_custom_call.1} parent=0
    #allocation2 [shape = 'u8[65536]{0}', space=vmem, size = 0x10000, scoped, tag = 'input window, operand 1']
    #allocation3 [shape = 's32[2]{0}', space=sflag, size = 0x8, scoped, tag = 'scoped memory for tpu_custom_call.1']
    #allocation4 [shape = 's32[2]{0}', space=sflag, size = 0x8, scoped, tag = 'scoped memory for tpu_custom_call.1']
    #allocation5 [shape = 'u8[131072]{0}', space=vmem, size = 0x20000, scoped, tag = 'input window, operand 2, single buffered']
    #allocation6 [shape = 's32[1]{0}', space=sflag, size = 0x4, scoped, tag = 'scoped memory for tpu_custom_call.1']
    #allocation7 [shape = 'u8[8192]{0}', space=vmem, size = 0x2000, scoped, tag = 'output window, operand 0']
    %12 = vsyncpa [#allocation3], 0
    %s13 = scalar_lea.sflag [#allocation3], 1
    %14 = vsyncpa %s13, 0
    %15 = vsyncpa [#allocation6], 0
    %16 = vsyncpa [#allocation4], 0
    %s17 = scalar_lea.sflag [#allocation4], 1
    %18 = vsyncpa %s17, 0
    loop: start=0, step=1, limit=10
    $region2: #{tpu_custom_call.1} parent=1 // loop_pre_header
      _
    $region3: #{tpu_custom_call.1} parent=1 // loop_header
      %s20 = sphi 0, %s24
      %p21 = scmp.ge.s32.totalorder %s20, 10
      %s27 = sphi 0, %s46
      %s28 = sphi 0, %s42
      %s29 = sphi 0, %s38
      %s30 = sphi 0, %s27
      %s31 = sphi 0, %s28
      %s32 = sphi 0, %s29
      %s33 = sphi 0, %s30
      %s34 = sphi 0, %s31
      %s35 = sphi 0, %s32
      %s51 = sphi 0, %s53
      %s54 = sphi 0, %s51
      %s55 = sphi 0, %s54
      %s71 = sphi 0, %s55
      %s77 = sphi 0, %s79
      %s80 = sphi 0, %s77
      %s81 = sphi 0, %s80
      %s97 = sphi 0, %s81
      %s101 = sphi 0, %s101
      %s103 = sphi 0, %s101
      %s104 = sphi 0, %s103
      %s118 = sphi 0, %s104
      %s128 = sphi 0, %s130
      %s131 = sphi 0, %s128
      %s132 = sphi 0, %s131
      %s148 = sphi 0, %s132
      %s156 = sphi 0, %s158
      %s159 = sphi 0, %s156
      %s160 = sphi 0, %s159
      %s176 = sphi 0, %s160
      %s184 = sphi 0, %s186
      %s187 = sphi 0, %s184
      %s188 = sphi 0, %s187
      %s204 = sphi 0, %s188
      %s210 = sphi 0, %s212
      %s213 = sphi 0, %s210
      %s214 = sphi 0, %s213
      %s230 = sphi 0, %s214
      %s240 = sphi 0, %s242
      %s243 = sphi 0, %s240
      %s244 = sphi 0, %s243
      %s260 = sphi 0, %s244
    $region4: #{tpu_custom_call.1} parent=1 // loop_header_branch
      %23 = sbr.rel (%p21) target = $region8
    $region5: #{tpu_custom_call.1} parent=1 // loop_body
      %s25 = ssub.s32 %s20, 1
      %s26 = ssub.s32 %s20, 2
      %s36 = sadd.s32 1, %s29
      %p37 = scmp.ge.s32.totalorder %s36, 4
      %s38 = scalar_select %p37, 0, %s36
      %s39 = sadd.s32 1, %s28
      %s40 = scalar_select %p37, %s39, %s28
      %p41 = scmp.ge.s32.totalorder %s40, 1
      %s42 = scalar_select %p41, 0, %s40
      %s43 = sadd.s32 1, %s27
      %s44 = scalar_select %p41, %s43, %s27
      %p45 = scmp.ge.s32.totalorder %s44, 2
      %s46 = scalar_select %p45, 0, %s44
      %s47 = ssub.s32 %s27, %s46
      %s48 = ssub.s32 %s28, %s42
      %s49 = sor.u32 %s47, %s48
      %p50 = scmp.eq.s32.totalorder %s49, 0
      %s52 = sadd.s32 %s51, 1
      %s53 = scalar_select %p50, %s51, %s52
      %p56 = pneg %p50
      %p57 = scmp.eq.s32.totalorder %s20, 7
      %p58 = por %p56, %p57
      %p59 = scmp.ne.s32.totalorder %s51, %s54
      %p60 = scmp.eq.s32.totalorder %s20, 0
      %p61 = por %p59, %p60
      %p62 = scmp.ne.s32.totalorder %s51, %s54
      %p63 = scmp.eq.s32.totalorder %s25, 7
      %p64 = por %p62, %p63
      %p65 = scmp.ne.s32.totalorder %s54, %s55
      %p66 = scmp.eq.s32.totalorder %s25, 0
      %p67 = por %p65, %p66
      %p68 = scmp.ne.s32.totalorder %s54, %s55
      %p69 = scmp.eq.s32.totalorder %s26, 7
      %p70 = por %p68, %p69
      %p72 = scmp.ne.s32.totalorder %s55, %s71
      %p73 = scmp.eq.s32.totalorder %s26, 0
      %p74 = por %p72, %p73
      %s75 = ssub.s32 %s27, %s46
      %p76 = scmp.eq.s32.totalorder %s75, 0
      %s78 = sadd.s32 %s77, 1
      %s79 = scalar_select %p76, %s77, %s78
      %p82 = pneg %p76
      %p83 = scmp.eq.s32.totalorder %s20, 7
      %p84 = por %p82, %p83
      %p85 = scmp.ne.s32.totalorder %s77, %s80
      %p86 = scmp.eq.s32.totalorder %s20, 0
      %p87 = por %p85, %p86
      %p88 = scmp.ne.s32.totalorder %s77, %s80
      %p89 = scmp.eq.s32.totalorder %s25, 7
      %p90 = por %p88, %p89
      %p91 = scmp.ne.s32.totalorder %s80, %s81
      %p92 = scmp.eq.s32.totalorder %s25, 0
      %p93 = por %p91, %p92
      %p94 = scmp.ne.s32.totalorder %s80, %s81
      %p95 = scmp.eq.s32.totalorder %s26, 7
      %p96 = por %p94, %p95
      %p98 = scmp.ne.s32.totalorder %s81, %s97
      %p99 = scmp.eq.s32.totalorder %s26, 0
      %p100 = por %p98, %p99
      %s102 = sadd.s32 %s101, 1
      %p105 = scmp.eq.s32.totalorder %s20, 7
      %p106 = scmp.ne.s32.totalorder %s101, %s103
      %p107 = scmp.eq.s32.totalorder %s20, 0
      %p108 = por %p106, %p107
      %p109 = scmp.ne.s32.totalorder %s101, %s103
      %p110 = scmp.eq.s32.totalorder %s25, 7
      %p111 = por %p109, %p110
      %p112 = scmp.ne.s32.totalorder %s103, %s104
      %p113 = scmp.eq.s32.totalorder %s25, 0
      %p114 = por %p112, %p113
      %p115 = scmp.ne.s32.totalorder %s103, %s104
      %p116 = scmp.eq.s32.totalorder %s26, 7
      %p117 = por %p115, %p116
      %p119 = scmp.ne.s32.totalorder %s104, %s118
      %p120 = scmp.eq.s32.totalorder %s26, 0
      %p121 = por %p119, %p120
      %s122 = ssub.s32 %s27, %s46
      %s123 = ssub.s32 %s29, %s38
      %s124 = sor.u32 %s122, %s123
      %s125 = ssub.s32 %s28, %s42
      %s126 = sor.u32 %s124, %s125
      %p127 = scmp.eq.s32.totalorder %s126, 0
      %s129 = sadd.s32 %s128, 1
      %s130 = scalar_select %p127, %s128, %s129
      %p133 = pneg %p127
      %p134 = scmp.eq.s32.totalorder %s20, 7
      %p135 = por %p133, %p134
      %p136 = scmp.ne.s32.totalorder %s128, %s131
      %p137 = scmp.eq.s32.totalorder %s20, 0
      %p138 = por %p136, %p137
      %p139 = scmp.ne.s32.totalorder %s128, %s131
      %p140 = scmp.eq.s32.totalorder %s25, 7
      %p141 = por %p139, %p140
      %p142 = scmp.ne.s32.totalorder %s131, %s132
      %p143 = scmp.eq.s32.totalorder %s25, 0
      %p144 = por %p142, %p143
      %p145 = scmp.ne.s32.totalorder %s131, %s132
      %p146 = scmp.eq.s32.totalorder %s26, 7
      %p147 = por %p145, %p146
      %p149 = scmp.ne.s32.totalorder %s132, %s148
      %p150 = scmp.eq.s32.totalorder %s26, 0
      %p151 = por %p149, %p150
      %s152 = ssub.s32 %s27, %s46
      %s153 = ssub.s32 %s29, %s38
      %s154 = sor.u32 %s152, %s153
      %p155 = scmp.eq.s32.totalorder %s154, 0
      %s157 = sadd.s32 %s156, 1
      %s158 = scalar_select %p155, %s156, %s157
      %p161 = pneg %p155
      %p162 = scmp.eq.s32.totalorder %s20, 7
      %p163 = por %p161, %p162
      %p164 = scmp.ne.s32.totalorder %s156, %s159
      %p165 = scmp.eq.s32.totalorder %s20, 0
      %p166 = por %p164, %p165
      %p167 = scmp.ne.s32.totalorder %s156, %s159
      %p168 = scmp.eq.s32.totalorder %s25, 7
      %p169 = por %p167, %p168
      %p170 = scmp.ne.s32.totalorder %s159, %s160
      %p171 = scmp.eq.s32.totalorder %s25, 0
      %p172 = por %p170, %p171
      %p173 = scmp.ne.s32.totalorder %s159, %s160
      %p174 = scmp.eq.s32.totalorder %s26, 7
      %p175 = por %p173, %p174
      %p177 = scmp.ne.s32.totalorder %s160, %s176
      %p178 = scmp.eq.s32.totalorder %s26, 0
      %p179 = por %p177, %p178
      %s180 = ssub.s32 %s27, %s46
      %s181 = ssub.s32 %s28, %s42
      %s182 = sor.u32 %s180, %s181
      %p183 = scmp.eq.s32.totalorder %s182, 0
      %s185 = sadd.s32 %s184, 1
      %s186 = scalar_select %p183, %s184, %s185
      %p189 = pneg %p183
      %p190 = scmp.eq.s32.totalorder %s20, 7
      %p191 = por %p189, %p190
      %p192 = scmp.ne.s32.totalorder %s184, %s187
      %p193 = scmp.eq.s32.totalorder %s20, 0
      %p194 = por %p192, %p193
      %p195 = scmp.ne.s32.totalorder %s184, %s187
      %p196 = scmp.eq.s32.totalorder %s25, 7
      %p197 = por %p195, %p196
      %p198 = scmp.ne.s32.totalorder %s187, %s188
      %p199 = scmp.eq.s32.totalorder %s25, 0
      %p200 = por %p198, %p199
      %p201 = scmp.ne.s32.totalorder %s187, %s188
      %p202 = scmp.eq.s32.totalorder %s26, 7
      %p203 = por %p201, %p202
      %p205 = scmp.ne.s32.totalorder %s188, %s204
      %p206 = scmp.eq.s32.totalorder %s26, 0
      %p207 = por %p205, %p206
      %s208 = ssub.s32 %s27, %s46
      %p209 = scmp.eq.s32.totalorder %s208, 0
      %s211 = sadd.s32 %s210, 1
      %s212 = scalar_select %p209, %s210, %s211
      %p215 = pneg %p209
      %p216 = scmp.eq.s32.totalorder %s20, 7
      %p217 = por %p215, %p216
      %p218 = scmp.ne.s32.totalorder %s210, %s213
      %p219 = scmp.eq.s32.totalorder %s20, 0
      %p220 = por %p218, %p219
      %p221 = scmp.ne.s32.totalorder %s210, %s213
      %p222 = scmp.eq.s32.totalorder %s25, 7
      %p223 = por %p221, %p222
      %p224 = scmp.ne.s32.totalorder %s213, %s214
      %p225 = scmp.eq.s32.totalorder %s25, 0
      %p226 = por %p224, %p225
      %p227 = scmp.ne.s32.totalorder %s213, %s214
      %p228 = scmp.eq.s32.totalorder %s26, 7
      %p229 = por %p227, %p228
      %p231 = scmp.ne.s32.totalorder %s214, %s230
      %p232 = scmp.eq.s32.totalorder %s26, 0
      %p233 = por %p231, %p232
      %s234 = ssub.s32 %s27, %s46
      %s235 = ssub.s32 %s29, %s38
      %s236 = sor.u32 %s234, %s235
      %s237 = ssub.s32 %s28, %s42
      %s238 = sor.u32 %s236, %s237
      %p239 = scmp.eq.s32.totalorder %s238, 0
      %s241 = sadd.s32 %s240, 1
      %s242 = scalar_select %p239, %s240, %s241
      %p245 = pneg %p239
      %p246 = scmp.eq.s32.totalorder %s20, 7
      %p247 = por %p245, %p246
      %p248 = scmp.ne.s32.totalorder %s240, %s243
      %p249 = scmp.eq.s32.totalorder %s20, 0
      %p250 = por %p248, %p249
      %p251 = scmp.ne.s32.totalorder %s240, %s243
      %p252 = scmp.eq.s32.totalorder %s25, 7
      %p253 = por %p251, %p252
      %p254 = scmp.ne.s32.totalorder %s243, %s244
      %p255 = scmp.eq.s32.totalorder %s25, 0
      %p256 = por %p254, %p255
      %p257 = scmp.ne.s32.totalorder %s243, %s244
      %p258 = scmp.eq.s32.totalorder %s26, 7
      %p259 = por %p257, %p258
      %p261 = scmp.ne.s32.totalorder %s244, %s260
      %p262 = scmp.eq.s32.totalorder %s26, 0
      %p263 = por %p261, %p262
      %p264 = scmp.le.s32.totalorder 1, %s20
      %p265 = scmp.lt.s32.totalorder %s20, 9
      %p266 = pnand %p264, %p265
      %p267 = pneg %p266
      // Predicated region
      $region9: #{tpu_custom_call.1} parent=5 // pred_check
        _
      $region10: #{tpu_custom_call.1} parent=5 // pred_check_branch
        %269 = sbr.rel (%p266) target = $region12
      $region11: #{tpu_custom_call.1} parent=5 // pred_region
        %s270 = ssub.s32 %s20, 1
        // Predicated region
        $region13: #{tpu_custom_call.1} parent=11 // pred_check
          %p271 = pneg %p114
        $region14: #{tpu_custom_call.1} parent=11 // pred_check_branch
          %273 = sbr.rel (%p271) target = $region16
        $region15: #{tpu_custom_call.1} parent=11 // pred_region
          %275 = vsyncadd [#allocation6], 0
          %s276 = sshll.u32 %s2, 4
          %s277 = int_to_ptr.hbm [resolvable:$true] %s276
          %s278 = sshll.u32 [#allocation5], 4
          %s279 = int_to_ptr.vmem [resolvable:$true] %s278
          %284 = dma.hbm_to_vmem [thread:$0]  %s277, 4096, %s279, [#allocation6], 64, 64, 4
        $region16: #{tpu_custom_call.1} parent=11 // pred_fallthru
          _
      $region12: #{tpu_custom_call.1} parent=5 // pred_fallthru
        _
      %p285 = scmp.lt.s32.totalorder %s20, 8
      // Predicated region
      $region17: #{tpu_custom_call.1} parent=5 // pred_check
        %p286 = pneg %p285
      $region18: #{tpu_custom_call.1} parent=5 // pred_check_branch
        %288 = sbr.rel (%p286) target = $region20
      $region19: #{tpu_custom_call.1} parent=5 // pred_region
        // Predicated region
        $region21: #{tpu_custom_call.1} parent=19 // pred_check
          %p289 = pneg %p61
        $region22: #{tpu_custom_call.1} parent=19 // pred_check_branch
          %291 = sbr.rel (%p289) target = $region24
        $region23: #{tpu_custom_call.1} parent=19 // pred_region
          %p292 = scmp.lt.s32.totalorder %s27, 1
          %s293 = scalar_select %p292, %s27, 1
          %p294 = scmp.lt.s32.totalorder %s28, 0
          %s295 = scalar_select %p294, %s28, 0
          %s296 = sadd.s32 %s295, %s293
          %s297 = smul.addr %s296, 4
          %s298 = scalar_lea.vmem %s0, %s297
        $region24: #{tpu_custom_call.1} parent=19 // pred_fallthru
          _
        // Predicated region
        $region25: #{tpu_custom_call.1} parent=19 // pred_check
          %p299 = pneg %p87
        $region26: #{tpu_custom_call.1} parent=19 // pred_check_branch
          %301 = sbr.rel (%p299) target = $region28
        $region27: #{tpu_custom_call.1} parent=19 // pred_region
          %s302 = sand.u32 %s77, 1
          %s303 = scalar_lea.sflag [#allocation3], %s302
          %s304 = sand.u32 %s77, 1
          %s305 = smul.addr %s304, 64
          %s306 = scalar_lea.vmem [#allocation2], %s305
          %308 = vsyncadd %s303, 0
          %s309 = smul.addr %s27, 16
          %s310 = smul.addr %s309, 4
          %s311 = scalar_lea.hbm %s1, %s310
          %s312 = sshll.u32 %s311, 4
          %s313 = int_to_ptr.hbm [resolvable:$true] %s312
          %s314 = sshll.u32 %s306, 4
          %s315 = int_to_ptr.vmem [resolvable:$true] %s314
          %320 = dma.hbm_to_vmem [thread:$0]  %s313, 1024, %s315, %s303, 64, 64, 4
        $region28: #{tpu_custom_call.1} parent=19 // pred_fallthru
          _
        // Predicated region
        $region29: #{tpu_custom_call.1} parent=19 // pred_check
          %p321 = pneg %p138
        $region30: #{tpu_custom_call.1} parent=19 // pred_check_branch
          %323 = sbr.rel (%p321) target = $region32
        $region31: #{tpu_custom_call.1} parent=19 // pred_region
          %p324 = scmp.lt.s32.totalorder %s27, 1
          %s325 = scalar_select %p324, %s27, 1
          %p326 = scmp.lt.s32.totalorder %s29, 3
          %s327 = scalar_select %p326, %s29, 3
          %p328 = scmp.lt.s32.totalorder %s28, 0
          %s329 = scalar_select %p328, %s28, 0
          %s330 = sadd.s32 %s329, %s327
          %s331 = smul.addr %s325, 4
          %s332 = sadd.s32 %s330, %s331
          %s333 = smul.addr %s332, 8
          %s334 = scalar_lea.vmem %s3, %s333
        $region32: #{tpu_custom_call.1} parent=19 // pred_fallthru
          _
        // Predicated region
        $region33: #{tpu_custom_call.1} parent=19 // pred_check
          %p335 = pneg %p166
        $region34: #{tpu_custom_call.1} parent=19 // pred_check_branch
          %337 = sbr.rel (%p335) target = $region36
        $region35: #{tpu_custom_call.1} parent=19 // pred_region
          %p338 = scmp.lt.s32.totalorder %s27, 1
          %s339 = scalar_select %p338, %s27, 1
          %p340 = scmp.lt.s32.totalorder %s29, 3
          %s341 = scalar_select %p340, %s29, 3
          %s342 = smul.addr %s339, 4
          %s343 = sadd.s32 %s341, %s342
          %s344 = scalar_lea.vmem %s4, %s343
        $region36: #{tpu_custom_call.1} parent=19 // pred_fallthru
          _
        // Predicated region
        $region37: #{tpu_custom_call.1} parent=19 // pred_check
          %p345 = pneg %p194
        $region38: #{tpu_custom_call.1} parent=19 // pred_check_branch
          %347 = sbr.rel (%p345) target = $region40
        $region39: #{tpu_custom_call.1} parent=19 // pred_region
          %p348 = scmp.lt.s32.totalorder %s27, 1
          %s349 = scalar_select %p348, %s27, 1
          %p350 = scmp.lt.s32.totalorder %s28, 0
          %s351 = scalar_select %p350, %s28, 0
          %s352 = sadd.s32 %s351, %s349
          %s353 = smul.addr %s352, 8
          %s354 = scalar_lea.vmem %s5, %s353
        $region40: #{tpu_custom_call.1} parent=19 // pred_fallthru
          _
        // Predicated region
        $region41: #{tpu_custom_call.1} parent=19 // pred_check
          %p355 = pneg %p220
        $region42: #{tpu_custom_call.1} parent=19 // pred_check_branch
          %357 = sbr.rel (%p355) target = $region44
        $region43: #{tpu_custom_call.1} parent=19 // pred_region
          %p358 = scmp.lt.s32.totalorder %s27, 1
          %s359 = scalar_select %p358, %s27, 1
          %s360 = scalar_lea.vmem %s6, %s359
        $region44: #{tpu_custom_call.1} parent=19 // pred_fallthru
          _
      $region20: #{tpu_custom_call.1} parent=5 // pred_fallthru
        _
      %p361 = scmp.le.s32.totalorder 1, %s20
      %p362 = scmp.lt.s32.totalorder %s20, 9
      %p363 = pnand %p361, %p362
      %p364 = pneg %p363
      // Predicated region
      $region45: #{tpu_custom_call.1} parent=5 // pred_check
        _
      $region46: #{tpu_custom_call.1} parent=5 // pred_check_branch
        %366 = sbr.rel (%p363) target = $region48
      $region47: #{tpu_custom_call.1} parent=5 // pred_region
        %s367 = ssub.s32 %s20, 1
        %s368 = sand.u32 %s80, 1
        %s369 = scalar_lea.sflag [#allocation3], %s368
        %s370 = sand.u32 %s80, 1
        %s371 = smul.addr %s370, 64
        %s372 = scalar_lea.vmem [#allocation2], %s371
        // Predicated region
        $region49: #{tpu_custom_call.1} parent=47 // pred_check
          %p373 = pneg %p93
        $region50: #{tpu_custom_call.1} parent=47 // pred_check_branch
          %375 = sbr.rel (%p373) target = $region52
        $region51: #{tpu_custom_call.1} parent=47 // pred_region
          %377 = dma.done %s369, 1024
        $region52: #{tpu_custom_call.1} parent=47 // pred_fallthru
          _
        // Predicated region
        $region53: #{tpu_custom_call.1} parent=47 // pred_check
          %p378 = pneg %p114
        $region54: #{tpu_custom_call.1} parent=47 // pred_check_branch
          %380 = sbr.rel (%p378) target = $region56
        $region55: #{tpu_custom_call.1} parent=47 // pred_region
          %382 = dma.done [#allocation6], 4096
        $region56: #{tpu_custom_call.1} parent=47 // pred_fallthru
          _
        %p383 = scmp.lt.s32.totalorder %s30, 1
        %s384 = scalar_select %p383, %s30, 1
        %p385 = scmp.lt.s32.totalorder %s31, 0
        %s386 = scalar_select %p385, %s31, 0
        %s387 = sadd.s32 %s386, %s384
        %s388 = smul.addr %s387, 4
        %s389 = scalar_lea.vmem %s0, %s388
        %p390 = pneg %p67
        %p391 = pneg %p64
        %s392 = sand.u32 %s80, 1
        %s393 = scalar_lea.sflag [#allocation3], %s392
        %s394 = sand.u32 %s80, 1
        %s395 = smul.addr %s394, 64
        %s396 = scalar_lea.vmem [#allocation2], %s395
        %p397 = pneg %p93
        %p398 = pneg %p90
        %p399 = pneg %p114
        %p400 = pneg %p111
        %p401 = scmp.lt.s32.totalorder %s30, 1
        %s402 = scalar_select %p401, %s30, 1
        %p403 = scmp.lt.s32.totalorder %s32, 3
        %s404 = scalar_select %p403, %s32, 3
        %p405 = scmp.lt.s32.totalorder %s31, 0
        %s406 = scalar_select %p405, %s31, 0
        %s407 = sadd.s32 %s406, %s404
        %s408 = smul.addr %s402, 4
        %s409 = sadd.s32 %s407, %s408
        %s410 = smul.addr %s409, 8
        %s411 = scalar_lea.vmem %s3, %s410
        %p412 = pneg %p144
        %p413 = pneg %p141
        %p414 = scmp.lt.s32.totalorder %s30, 1
        %s415 = scalar_select %p414, %s30, 1
        %p416 = scmp.lt.s32.totalorder %s32, 3
        %s417 = scalar_select %p416, %s32, 3
        %s418 = smul.addr %s415, 4
        %s419 = sadd.s32 %s417, %s418
        %s420 = scalar_lea.vmem %s4, %s419
        %p421 = pneg %p172
        %p422 = pneg %p169
        %p423 = scmp.lt.s32.totalorder %s30, 1
        %s424 = scalar_select %p423, %s30, 1
        %p425 = scmp.lt.s32.totalorder %s31, 0
        %s426 = scalar_select %p425, %s31, 0
        %s427 = sadd.s32 %s426, %s424
        %s428 = smul.addr %s427, 8
        %s429 = scalar_lea.vmem %s5, %s428
        %p430 = pneg %p200
        %p431 = pneg %p197
        %p432 = scmp.lt.s32.totalorder %s30, 1
        %s433 = scalar_select %p432, %s30, 1
        %s434 = scalar_lea.vmem %s6, %s433
        %p435 = pneg %p226
        %p436 = pneg %p223
        %p437 = pneg %p256
        %p438 = pneg %p253
        %s439 = sand.u32 %s243, 1
        %s440 = scalar_lea.sflag [#allocation4], %s439
        %s441 = sand.u32 %s243, 1
        %s442 = smul.addr %s441, 8
        %s443 = scalar_lea.vmem [#allocation7], %s442
        %p444 = scmp.lt.s32.totalorder %s30, 1
        %s445 = scalar_select %p444, %s30, 1
        %p446 = scmp.lt.s32.totalorder %s31, 0
        %s447 = scalar_select %p446, %s31, 0
        %s448 = sadd.s32 %s447, %s445
        %s449 = smul.addr %s448, 4
        %s450 = scalar_lea.vmem %s0, %s449
        %p451 = scmp.lt.s32.totalorder %s30, 1
        %s452 = scalar_select %p451, %s30, 1
        %p453 = scmp.lt.s32.totalorder %s32, 3
        %s454 = scalar_select %p453, %s32, 3
        %p455 = scmp.lt.s32.totalorder %s31, 0
        %s456 = scalar_select %p455, %s31, 0
        %s457 = sadd.s32 %s456, %s454
        %s458 = smul.addr %s452, 4
        %s459 = sadd.s32 %s457, %s458
        %s460 = smul.addr %s459, 8
        %s461 = scalar_lea.vmem %s3, %s460
        %p462 = scmp.lt.s32.totalorder %s30, 1
        %s463 = scalar_select %p462, %s30, 1
        %p464 = scmp.lt.s32.totalorder %s32, 3
        %s465 = scalar_select %p464, %s32, 3
        %s466 = smul.addr %s463, 4
        %s467 = sadd.s32 %s465, %s466
        %s468 = scalar_lea.vmem %s4, %s467
        %p469 = scmp.lt.s32.totalorder %s30, 1
        %s470 = scalar_select %p469, %s30, 1
        %p471 = scmp.lt.s32.totalorder %s31, 0
        %s472 = scalar_select %p471, %s31, 0
        %s473 = sadd.s32 %s472, %s470
        %s474 = smul.addr %s473, 8
        %s475 = scalar_lea.vmem %s5, %s474
        %p476 = scmp.lt.s32.totalorder %s30, 1
        %s477 = scalar_select %p476, %s30, 1
        %s478 = scalar_lea.vmem %s6, %s477
        %v479 = vld [vmem:[%s450] sm:$0xf]
        %v480 = vld [vmem:[%s372] sm:$0xf]
        %v481 = vld [vmem:[%s372 + $0x4] sm:$0xf]
        %v482 = vld [vmem:[%s372 + $0x8] sm:$0xf]
        %v483 = vld [vmem:[%s372 + $0xc] sm:$0xf]
        %v484 = vld [vmem:[%s372 + $0x10] sm:$0xf]
        %v485 = vld [vmem:[%s372 + $0x14] sm:$0xf]
        %v486 = vld [vmem:[%s372 + $0x18] sm:$0xf]
        %v487 = vld [vmem:[%s372 + $0x1c] sm:$0xf]
        %v488 = vld [vmem:[%s372 + $0x20] sm:$0xf]
        %v489 = vld [vmem:[%s372 + $0x24] sm:$0xf]
        %v490 = vld [vmem:[%s372 + $0x28] sm:$0xf]
        %v491 = vld [vmem:[%s372 + $0x2c] sm:$0xf]
        %v492 = vld [vmem:[%s372 + $0x30] sm:$0xf]
        %v493 = vld [vmem:[%s372 + $0x34] sm:$0xf]
        %v494 = vld [vmem:[%s372 + $0x38] sm:$0xf]
        %v495 = vld [vmem:[%s372 + $0x3c] sm:$0xf]
        %s496 = smul.u32 %s32, 16
        %s497 = smul.addr %s496, 4
        %s498 = scalar_lea.vmem [#allocation5], %s497
        %v499 = vld [vmem:[%s498] sm:$0xf]
        %v500 = vld [vmem:[%s498 + $0x4] sm:$0xf]
        %v501 = vld [vmem:[%s498 + $0x8] sm:$0xf]
        %v502 = vld [vmem:[%s498 + $0xc] sm:$0xf]
        %v503 = vld [vmem:[%s498 + $0x10] sm:$0xf]
        %v504 = vld [vmem:[%s498 + $0x14] sm:$0xf]
        %v505 = vld [vmem:[%s498 + $0x18] sm:$0xf]
        %v506 = vld [vmem:[%s498 + $0x1c] sm:$0xf]
        %v507 = vld [vmem:[%s498 + $0x20] sm:$0xf]
        %v508 = vld [vmem:[%s498 + $0x24] sm:$0xf]
        %v509 = vld [vmem:[%s498 + $0x28] sm:$0xf]
        %v510 = vld [vmem:[%s498 + $0x2c] sm:$0xf]
        %v511 = vld [vmem:[%s498 + $0x30] sm:$0xf]
        %v512 = vld [vmem:[%s498 + $0x34] sm:$0xf]
        %v513 = vld [vmem:[%s498 + $0x38] sm:$0xf]
        %v514 = vld [vmem:[%s498 + $0x3c] sm:$0xf]
        %v531 = vunpack.c.l.b16 %v499
        %v532 = vunpack.c.l.b16 %v500
        %v533 = vunpack.c.l.b16 %v501
        %v534 = vunpack.c.l.b16 %v502
        %v535 = vunpack.c.l.b16 %v503
        %v536 = vunpack.c.l.b16 %v504
        %v537 = vunpack.c.l.b16 %v505
        %v538 = vunpack.c.l.b16 %v506
        %v539 = vunpack.c.l.b16 %v507
        %v540 = vunpack.c.l.b16 %v508
        %v541 = vunpack.c.l.b16 %v509
        %v542 = vunpack.c.l.b16 %v510
        %v543 = vunpack.c.l.b16 %v511
        %v544 = vunpack.c.l.b16 %v512
        %v545 = vunpack.c.l.b16 %v513
        %v546 = vunpack.c.l.b16 %v514
        %v547 = vpack.c.b16 %v532, %v531
        %v548 = vpack.c.b16 %v534, %v533
        %v549 = vpack.c.b16 %v536, %v535
        %v550 = vpack.c.b16 %v538, %v537
        %v551 = vpack.c.b16 %v540, %v539
        %v552 = vpack.c.b16 %v542, %v541
        %v553 = vpack.c.b16 %v544, %v543
        %v554 = vpack.c.b16 %v546, %v545
        %563 = vmatpush.bf16.msra.mxu0 %v554
        %564 = vmatpush.bf16.msra.mxu0 %v553
        %565 = vmatpush.bf16.msra.mxu0 %v552
        %566 = vmatpush.bf16.msra.mxu0 %v551
        %567 = vmatpush.bf16.msra.mxu0 %v550
        %568 = vmatpush.bf16.msra.mxu0 %v549
        %569 = vmatpush.bf16.msra.mxu0 %v548
        %570 = vmatpush.bf16.msra.mxu0 %v547
        %571 = vmatmul.bf16.gmra.mxu0 %v479
        %v572 = vpop.f32.mrf.mxu0
        %v573 = vadd.f32 0.0, %v572
        %v574 = vpop.f32.mrf.mxu0
        %575 = vdwg.mxu0
        %v576 = vpack.c.bf16 %v573, %v573
        %v577 = vld [vmem:[%s461] sm:$0xff]
        %579 = vset.pattern.permute.xlu0 0
        %580 = vperm.xlu0 %579, %v577
        %v581 = vpop.permute.xlu0 %580
        %v599 = vunpack.c.l.b16 %v480
        %v600 = vunpack.c.l.b16 %v481
        %v601 = vunpack.c.l.b16 %v482
        %v602 = vunpack.c.l.b16 %v483
        %v603 = vunpack.c.l.b16 %v484
        %v604 = vunpack.c.l.b16 %v485
        %v605 = vunpack.c.l.b16 %v486
        %v606 = vunpack.c.l.b16 %v487
        %v607 = vunpack.c.l.b16 %v488
        %v608 = vunpack.c.l.b16 %v489
        %v609 = vunpack.c.l.b16 %v490
        %v610 = vunpack.c.l.b16 %v491
        %v611 = vunpack.c.l.b16 %v492
        %v612 = vunpack.c.l.b16 %v493
        %v613 = vunpack.c.l.b16 %v494
        %v614 = vunpack.c.l.b16 %v495
        %v615 = vpack.c.b16 %v600, %v599
        %v616 = vpack.c.b16 %v602, %v601
        %v617 = vpack.c.b16 %v604, %v603
        %v618 = vpack.c.b16 %v606, %v605
        %v619 = vpack.c.b16 %v608, %v607
        %v620 = vpack.c.b16 %v610, %v609
        %v621 = vpack.c.b16 %v612, %v611
        %v622 = vpack.c.b16 %v614, %v613
        %631 = vmatpush.bf16.msra.mxu0 %v622
        %632 = vmatpush.bf16.msra.mxu0 %v621
        %633 = vmatpush.bf16.msra.mxu0 %v620
        %634 = vmatpush.bf16.msra.mxu0 %v619
        %635 = vmatpush.bf16.msra.mxu0 %v618
        %636 = vmatpush.bf16.msra.mxu0 %v617
        %637 = vmatpush.bf16.msra.mxu0 %v616
        %638 = vmatpush.bf16.msra.mxu0 %v615
        %639 = vmatmul.bf16.gmra.mxu0 %v576
        %v640 = vpop.f32.mrf.mxu0
        %v641 = vadd.f32 %v581, %v640
        %v642 = vpop.f32.mrf.mxu0
        %643 = vdwg.mxu0
        %v644 = vld [vmem:[%s468] sm:$0x1]
        %v646 = vperm.slane %v644, 0
        %v648 = vadd.f32 %v641, %v646
        %v649 = vld [vmem:[%s475] sm:$0xff]
        %651 = vset.pattern.permute.xlu0 0
        %652 = vperm.xlu0 %651, %v649
        %v653 = vpop.permute.xlu0 %652
        %v655 = vmul.f32 %v648, %v653
        %v656 = vld [vmem:[%s478] sm:$0x1]
        %v658 = vperm.slane %v656, 0
        %v660 = vmul.f32 %v655, %v658
        %661 = vst [vmem:[%s443] sm:$0xff] %v660
        %s662 = sand.u32 %s243, 1
        %s663 = scalar_lea.sflag [#allocation4], %s662
        %s664 = sand.u32 %s243, 1
        %s665 = smul.addr %s664, 8
        %s666 = scalar_lea.vmem [#allocation7], %s665
        // Predicated region
        $region57: #{tpu_custom_call.1} parent=47 // pred_check
          %p667 = pneg %p253
        $region58: #{tpu_custom_call.1} parent=47 // pred_check_branch
          %669 = sbr.rel (%p667) target = $region60
        $region59: #{tpu_custom_call.1} parent=47 // pred_region
          %671 = vsyncadd %s663, 0
          %s672 = sadd.s32 %s31, %s32
          %s673 = smul.addr %s30, 4
          %s674 = sadd.s32 %s672, %s673
          %s675 = smul.addr %s674, 8
          %s676 = scalar_lea.hbm %s7, %s675
          %s678 = sshll.u32 %s666, 4
          %s679 = int_to_ptr.vmem [resolvable:$true] %s678
          %s680 = sshll.u32 %s676, 4
          %s681 = int_to_ptr.hbm [resolvable:$true] %s680
          %683 = dma.vmem_to_hbm [thread:$0]  %s679, 128, %s681, %s663
        $region60: #{tpu_custom_call.1} parent=47 // pred_fallthru
          _
      $region48: #{tpu_custom_call.1} parent=5 // pred_fallthru
        _
      %p684 = scmp.le.s32.totalorder 2, %s20
      // Predicated region
      $region61: #{tpu_custom_call.1} parent=5 // pred_check
        %p685 = pneg %p684
      $region62: #{tpu_custom_call.1} parent=5 // pred_check_branch
        %687 = sbr.rel (%p685) target = $region64
      $region63: #{tpu_custom_call.1} parent=5 // pred_region
        %s688 = ssub.s32 %s20, 2
        // Predicated region
        $region65: #{tpu_custom_call.1} parent=63 // pred_check
          %p689 = pneg %p259
        $region66: #{tpu_custom_call.1} parent=63 // pred_check_branch
          %691 = sbr.rel (%p689) target = $region68
        $region67: #{tpu_custom_call.1} parent=63 // pred_region
          %s692 = sand.u32 %s244, 1
          %s693 = scalar_lea.sflag [#allocation4], %s692
          %s694 = sand.u32 %s244, 1
          %s695 = smul.addr %s694, 8
          %s696 = scalar_lea.vmem [#allocation7], %s695
          %698 = dma.done %s693, 128
        $region68: #{tpu_custom_call.1} parent=63 // pred_fallthru
          _
      $region64: #{tpu_custom_call.1} parent=5 // pred_fallthru
        _
    $region6: #{tpu_custom_call.1} parent=1 // loop_footer
      %s24 = sadd.s32 1, %s20
    $region7: #{tpu_custom_call.1} parent=1 // loop_footer_branch
      %19 = sbr.rel target = $region3
    $region8: #{tpu_custom_call.1} parent=1 // loop_exit
      _
    %699 = vsyncpa [#allocation3], 1
    %s700 = scalar_lea.sflag [#allocation3], 1
    %701 = vsyncpa %s700, 1
    %702 = vsyncpa [#allocation6], 1
    %703 = vsyncpa [#allocation4], 1
    %s704 = scalar_lea.sflag [#allocation4], 1
    %705 = vsyncpa %s704, 1

</llo_original>
